<compile_context>
chip_gen: v5e
topology: v5e:2x2
jax: 0.10.0
libtpu: 0.0.40
codegen_flags: <defaults>
</compile_context>

<pallas_src>
import numpy as np
import jax
import jax.numpy as jnp
from jax.experimental import pallas as pl
from jax.experimental.pallas import tpu as pltpu

_SQRT2_INV = 1.0 / np.sqrt(2.0)
# pywt.Wavelet('db1'): dec_lo = [1/sqrt(2), 1/sqrt(2)], dec_hi = [-1/sqrt(2), 1/sqrt(2)]
_WAVELETS = {
    "db1": (
        np.array([_SQRT2_INV, _SQRT2_INV], dtype=np.float64),
        np.array([-_SQRT2_INV, _SQRT2_INV], dtype=np.float64),
    ),
}
# TODO(synk): longer pywt wavelets (db2, ...) need K>2 taps (the stride-2 row combine
# below is K=2-specific), the afb1d per-dimension padding rules, and H/W spatial tiling
# for planes too large to fit a single VMEM block (v7x 64 MiB).


# ----------------------------- Pallas kernel --------------------------------
def _make_level_kernel(TB, Hp, Wp, Hh, W2, row_lo, row_hi, out_scale):
    """Build the kernel closure for one DWT level (constants baked at trace time)."""
    M = TB * Hp          # slab rows fed to the MXU
    Mh = TB * Hh         # output rows per row-pass band
    rl0, rl1 = float(row_lo[0]), float(row_lo[1])
    rh0, rh1 = float(row_hi[0]), float(row_hi[1])
    scale = float(out_scale)

    def kernel(x_ref, c_ref, o_ref, z_ref):
        # x_ref: (TB, Hp, Wp) input planes      c_ref: (Wp, W2) = [C_lo | C_hi]
        # o_ref: (2, TB, Hh, W2) = [row-lo, row-hi] x lanes [col-lo | col-hi]
        # z_ref: (TB*Hp, W2) f32 scratch holding the column-pass result
        slab = x_ref[...].reshape(M, Wp)
        # Column pass: single MXU matmul, lane-dense result.
        z_ref[...] = jnp.dot(slab, c_ref[...], preferred_element_type=jnp.float32)
        # Row pass: stride-2 sublane reads (Hp == 2*Hh for db1, so plane boundaries are
        # never crossed inside the slab); pure VPU/load-slot work, no MXU.
        z_even = z_ref[pl.ds(0, Mh, stride=2)]
        z_odd = z_ref[pl.ds(1, Mh, stride=2)]
        low = scale * (rl0 * z_even + rl1 * z_odd)
        high = scale * (rh0 * z_even + rh1 * z_odd)
        o_ref[0] = low.reshape(TB, Hh, W2).astype(o_ref.dtype)
        o_ref[1] = high.reshape(TB, Hh, W2).astype(o_ref.dtype)

    return kernel


def _choose_tb(B, Hp, Wp, Hh, W2, itemsize):
    """Largest divisor of B whose block (+ double buffers + f32 scratch) fits a small
    VMEM budget, leaving >= 2 grid steps for megacore sharding when B > 1."""
    per_plane = (
        2 * Hp * Wp * itemsize          # x block (double-buffered)
        + 2 * 2 * Hh * W2 * itemsize    # out block (double-buffered)
        + Hp * W2 * 4                   # f32 scratch (single buffer)
    )
    budget = 12 << 20                   # well under default scoped VMEM on v5e/v6e/v7x
    max_tb = max(1, budget // max(per_plane, 1))
    cap = min(max_tb, B if B == 1 else max(1, B // 2))
    tb = 1
    for d in range(1, B + 1):
        if B % d == 0 and d <= cap:
            tb = d
    return tb


# ------------------------------- JAX glue ------------------------------------
def _build_col_matrix(Wp, Wh, col_lo, col_hi, dtype):
    """(Wp, 2*Wh) 'filter + stride-2' matrix with [lo | hi] concatenated on lanes."""
    K = len(col_lo)
    C = np.zeros((Wp, 2 * Wh), dtype=np.float64)
    for j in range(Wh):
        for b in range(K):
            C[2 * j + b, j] = col_lo[b]
            C[2 * j + b, Wh + j] = col_hi[b]
    return jnp.asarray(C, dtype)


def _dwt_level_pallas(x_pad, lo_f, hi_f):
    """One DWT level: x_pad (N, C, Hp, Wp) -> (N, C, 4, H', W') bands [LL, LH, HL, HH]."""
    N, C, Hp, Wp = x_pad.shape
    K = len(lo_f)
    Hh = (Hp - K) // 2 + 1
    Wh = (Wp - K) // 2 + 1
    W2 = 2 * Wh
    B = N * C
    itemsize = jnp.dtype(x_pad.dtype).itemsize
    TB = _choose_tb(B, Hp, Wp, Hh, W2, itemsize)

    # Use unscaled taps (+-1 for Haar, exactly representable even in bf16) and fold the
    # removed scales into a single final multiply: exact vs. the scaled-f32 path.
    tap_scale = float(np.max(np.abs(np.concatenate([lo_f, hi_f]))))
    lo_u = lo_f / tap_scale
    hi_u = hi_f / tap_scale
    out_scale = tap_scale * tap_scale

    ccat = _build_col_matrix(Wp, Wh, lo_u, hi_u, x_pad.dtype)
    xb = x_pad.reshape(B, Hp, Wp)

    kernel = _make_level_kernel(TB, Hp, Wp, Hh, W2, lo_u, hi_u, out_scale)
    out = pl.pallas_call(
        kernel,
        out_shape=jax.ShapeDtypeStruct((2, B, Hh, W2), x_pad.dtype),
        grid=(B // TB,),
        in_specs=[
            pl.BlockSpec((TB, Hp, Wp), lambda b: (b, 0, 0)),
            # constant index_map: block never changes across the grid, so it is not
            # re-DMA'd per step (it stays resident).
            pl.BlockSpec((Wp, W2), lambda b: (0, 0)),
        ],
        out_specs=pl.BlockSpec((2, TB, Hh, W2), lambda b: (0, b, 0, 0)),
        scratch_shapes=[pltpu.VMEM((TB * Hp, W2), jnp.float32)],
        compiler_params=pltpu.CompilerParams(
            dimension_semantics=("parallel",),
            vmem_limit_bytes=32 * 1024 * 1024,
        ),
    )(xb, ccat)

    # (row-pass, B, Hh, [col-lo | col-hi]) -> (N, C, 4, Hh, Wh), bands [LL, LH, HL, HH]
    out = out.reshape(2, N, C, Hh, 2, Wh)                 # (rp, n, c, i, cp, j)
    y = jnp.transpose(out, (1, 2, 4, 0, 3, 5)).reshape(N, C, 4, Hh, Wh)
    return y


def dwt_forward(x, J=1, wave="db1"):
    """JAX/Pallas equivalent of DWTForward(J=J, wave=wave)(x) -> (yl, yh)."""
    dec_lo, dec_hi = _WAVELETS[wave]
    K = len(dec_lo)
    # PyTorch stores spatially flipped filters and conv2d cross-correlates, so the
    # effective forward-order 1D taps are the flipped dec_lo / dec_hi.
    lo_f = dec_lo[::-1].copy()
    hi_f = dec_hi[::-1].copy()
    sz = 2 * (K // 2 - 1)

    yl = x
    yh = []
    for _ in range(J):
        Hc, Wc = yl.shape[-2], yl.shape[-1]
        pad_b = sz + (1 if Hc % 2 == 1 else 0)
        pad_r = sz + (1 if Wc % 2 == 1 else 0)
        if sz > 0 or pad_b > 0 or pad_r > 0:
            yl = jnp.pad(yl, ((0, 0), (0, 0), (sz, pad_b), (sz, pad_r)), mode="reflect")
        y = _dwt_level_pallas(yl, lo_f, hi_f)             # (N, C, 4, H', W')
        yl = y[:, :, 0]
        yh.append(y[:, :, 1:])
    return yl, yh


# ------------------------------ reference ------------------------------------
def _ref_dwt_level(x_pad, dec_lo, dec_hi):
    """Pure-jnp reference reproducing F.conv2d(groups=C, stride=2) with the
    PyTorch-stored (flipped) 2D filters, band order [LL, LH, HL, HH]."""
    ll = np.outer(dec_lo, dec_lo)
    lh = np.outer(dec_hi, dec_lo)
    hl = np.outer(dec_lo, dec_hi)
    hh = np.outer(dec_hi, dec_hi)
    Wk = np.stack([ll[::-1, ::-1], lh[::-1, ::-1], hl[::-1, ::-1], hh[::-1, ::-1]], axis=0)
    K = Wk.shape[-1]
    Hh = (x_pad.shape[-2] - K) // 2 + 1
    Wh = (x_pad.shape[-1] - K) // 2 + 1
    bands = []
    for k in range(4):
        acc = jnp.zeros(x_pad.shape[:2] + (Hh, Wh), x_pad.dtype)
        for a in range(K):
            for b in range(K):
                acc = acc + jnp.float32(Wk[k, a, b]) * x_pad[:, :, a:a + 2 * Hh:2, b:b + 2 * Wh:2]
        bands.append(acc)
    return jnp.stack(bands, axis=2)  # (N, C, 4, H', W')


def _ref_dwt_forward(x, J, wave):
    dec_lo, dec_hi = _WAVELETS[wave]
    K = len(dec_lo)
    sz = 2 * (K // 2 - 1)
    yl = x
    yh = []
    for _ in range(J):
        Hc, Wc = yl.shape[-2], yl.shape[-1]
        pad_b = sz + (1 if Hc % 2 == 1 else 0)
        pad_r = sz + (1 if Wc % 2 == 1 else 0)
        if sz > 0 or pad_b > 0 or pad_r > 0:
            yl = jnp.pad(yl, ((0, 0), (0, 0), (sz, pad_b), (sz, pad_r)), mode="reflect")
        y = _ref_dwt_level(yl, dec_lo, dec_hi)
        yl = y[:, :, 0]
        yh.append(y[:, :, 1:])
    return yl, yh


# --------------------------------- main ---------------------------------------
if __name__ == "__main__":
    key = jax.random.PRNGKey(0)
    x = jax.random.normal(key, (2, 4, 16, 16), dtype=jnp.float32)

    yl, yh = dwt_forward(x, J=1, wave="db1")
    yl = jax.block_until_ready(yl)
    yh = [jax.block_until_ready(h) for h in yh]

    assert yl.shape == (2, 4, 8, 8)
    assert len(yh) == 1 and yh[0].shape == (2, 4, 3, 8, 8)

    # correctness vs pure-JAX conv reference
    rl, rh = _ref_dwt_forward(x, 1, "db1")
    np.testing.assert_allclose(np.asarray(yl), np.asarray(rl), atol=1e-5, rtol=1e-5)
    np.testing.assert_allclose(np.asarray(yh[0]), np.asarray(rh[0]), atol=1e-5, rtol=1e-5)

    # odd spatial sizes + 2 decomposition levels (exercises reflect padding and the
    # multi-level path with the new blocked/batched layout)
    x2 = jax.random.normal(jax.random.PRNGKey(1), (1, 3, 15, 17), dtype=jnp.float32)
    yl2, yh2 = dwt_forward(x2, J=2, wave="db1")
    yl2 = jax.block_until_ready(yl2)
    yh2 = [jax.block_until_ready(h) for h in yh2]
    rl2, rh2 = _ref_dwt_forward(x2, 2, "db1")
    np.testing.assert_allclose(np.asarray(yl2), np.asarray(rl2), atol=1e-5, rtol=1e-5)
    for got, want in zip(yh2, rh2):
        np.testing.assert_allclose(np.asarray(got), np.asarray(want), atol=1e-5, rtol=1e-5)

    print("KERNEL_OK")
</pallas_src>

<mosaic_0001>
module attributes {stable_mosaic.version = 11 : i64} {
  func.func @kernel(%arg0: i32, %arg1: memref<4x16x16xf32, #tpu.memory_space<vmem>>, %arg2: memref<16x16xf32, #tpu.memory_space<vmem>>, %arg3: memref<2x4x8x16xf32, #tpu.memory_space<vmem>>, %arg4: memref<64x16xf32, #tpu.memory_space<vmem>>) attributes {dimension_semantics = [#tpu.dimension_semantics<parallel>], iteration_bounds = array<i64: 2>, scalar_prefetch = 0 : i64, scratch_operands = 1 : i64, tpu.core_type = #tpu.core_type<tc>, window_params = [{transform_indices = @transform_0, window_bounds = array<i64: 4, 16, 16>}, {pipeline_mode = #tpu.pipeline_mode<synchronous>, transform_indices = @transform_1, window_bounds = array<i64: 16, 16>}, {transform_indices = @transform_2, window_bounds = array<i64: 2, 4, 8, 16>}]} {
    %c0 = arith.constant 0 : index
    %c0_0 = arith.constant 0 : index
    %c0_1 = arith.constant 0 : index
    %0 = vector.load %arg1[%c0, %c0_0, %c0_1] : memref<4x16x16xf32, #tpu.memory_space<vmem>>, vector<4x16x16xf32>
    %1 = vector.shape_cast %0 : vector<4x16x16xf32> to vector<64x16xf32>
    %c0_2 = arith.constant 0 : index
    %c0_3 = arith.constant 0 : index
    %2 = vector.load %arg2[%c0_2, %c0_3] : memref<16x16xf32, #tpu.memory_space<vmem>>, vector<16x16xf32>
    %cst = arith.constant dense<0.000000e+00> : vector<64x16xf32>
    %3 = tpu.matmul %1, %2, %cst {dimension_numbers = #tpu.dot_dimension_numbers<[1], [0], [0], [1], [0, 0, 1, 1], [], []>} : vector<64x16xf32>, vector<16x16xf32>, vector<64x16xf32> -> vector<64x16xf32>
    %c0_4 = arith.constant 0 : index
    %c0_5 = arith.constant 0 : index
    %4 = vector.load %arg4[%c0_4, %c0_5] : memref<64x16xf32, #tpu.memory_space<vmem>>, vector<64x16xf32>
    tpu.vector_store %arg4[%c0_4, %c0_5], %3 {strides = array<i32>} : memref<64x16xf32, #tpu.memory_space<vmem>>, vector<64x16xf32>,
    %c0_6 = arith.constant 0 : index
    %c0_7 = arith.constant 0 : index
    %5 = tpu.strided_load %arg4[%c0_6, %c0_7] {strides = array<i32: 2, 1>} : memref<64x16xf32, #tpu.memory_space<vmem>>, vector<32x16xf32>
    %c1 = arith.constant 1 : index
    %c0_8 = arith.constant 0 : index
    %6 = tpu.strided_load %arg4[%c1, %c0_8] {strides = array<i32: 2, 1>} : memref<64x16xf32, #tpu.memory_space<vmem>>, vector<32x16xf32>
    %cst_9 = arith.constant 1.000000e+00 : f32
    %7 = vector.broadcast %cst_9 : f32 to vector<32x16xf32>
    %8 = arith.mulf %7, %5 : vector<32x16xf32>
    %cst_10 = arith.constant 1.000000e+00 : f32
    %9 = vector.broadcast %cst_10 : f32 to vector<32x16xf32>
    %10 = arith.mulf %9, %6 : vector<32x16xf32>
    %11 = arith.addf %8, %10 : vector<32x16xf32>
    %cst_11 = arith.constant 5.000000e-01 : f32
    %12 = vector.broadcast %cst_11 : f32 to vector<32x16xf32>
    %13 = arith.mulf %12, %11 : vector<32x16xf32>
    %cst_12 = arith.constant 1.000000e+00 : f32
    %14 = vector.broadcast %cst_12 : f32 to vector<32x16xf32>
    %15 = arith.mulf %14, %5 : vector<32x16xf32>
    %cst_13 = arith.constant -1.000000e+00 : f32
    %16 = vector.broadcast %cst_13 : f32 to vector<32x16xf32>
    %17 = arith.mulf %16, %6 : vector<32x16xf32>
    %18 = arith.addf %15, %17 : vector<32x16xf32>
    %cst_14 = arith.constant 5.000000e-01 : f32
    %19 = vector.broadcast %cst_14 : f32 to vector<32x16xf32>
    %20 = arith.mulf %19, %18 : vector<32x16xf32>
    %21 = vector.shape_cast %13 : vector<32x16xf32> to vector<4x8x16xf32>
    %c0_15 = arith.constant 0 : index
    %c0_16 = arith.constant 0 : index
    %c0_17 = arith.constant 0 : index
    %c0_18 = arith.constant 0 : index
    %22 = vector.load %arg3[%c0_15, %c0_16, %c0_17, %c0_18] : memref<2x4x8x16xf32, #tpu.memory_space<vmem>>, vector<1x4x8x16xf32>
    %23 = vector.shape_cast %22 : vector<1x4x8x16xf32> to vector<4x8x16xf32>
    %24 = vector.shape_cast %21 : vector<4x8x16xf32> to vector<1x4x8x16xf32>
    tpu.vector_store %arg3[%c0_15, %c0_16, %c0_17, %c0_18], %24 {strides = array<i32>} : memref<2x4x8x16xf32, #tpu.memory_space<vmem>>, vector<1x4x8x16xf32>,
    %25 = vector.shape_cast %20 : vector<32x16xf32> to vector<4x8x16xf32>
    %c1_19 = arith.constant 1 : index
    %c0_20 = arith.constant 0 : index
    %c0_21 = arith.constant 0 : index
    %c0_22 = arith.constant 0 : index
    %26 = vector.load %arg3[%c1_19, %c0_20, %c0_21, %c0_22] : memref<2x4x8x16xf32, #tpu.memory_space<vmem>>, vector<1x4x8x16xf32>
    %27 = vector.shape_cast %26 : vector<1x4x8x16xf32> to vector<4x8x16xf32>
    %28 = vector.shape_cast %25 : vector<4x8x16xf32> to vector<1x4x8x16xf32>
    tpu.vector_store %arg3[%c1_19, %c0_20, %c0_21, %c0_22], %28 {strides = array<i32>} : memref<2x4x8x16xf32, #tpu.memory_space<vmem>>, vector<1x4x8x16xf32>,
    return
  }
  func.func @transform_0(%arg0: i32) -> (i32, i32, i32) {
    %c0_i32 = arith.constant 0 : i32
    %c0_i32_0 = arith.constant 0 : i32
    %c0_i32_1 = arith.constant 0 : i32
    return %arg0, %c0_i32, %c0_i32_0 : i32, i32, i32
  }
  func.func @transform_1(%arg0: i32) -> (i32, i32) {
    %c0_i32 = arith.constant 0 : i32
    %c0_i32_0 = arith.constant 0 : i32
    %c0_i32_1 = arith.constant 0 : i32
    return %c0_i32, %c0_i32_0 : i32, i32
  }
  func.func @transform_2(%arg0: i32) -> (i32, i32, i32, i32) {
    %c0_i32 = arith.constant 0 : i32
    %c0_i32_0 = arith.constant 0 : i32
    %c0_i32_1 = arith.constant 0 : i32
    %c0_i32_2 = arith.constant 0 : i32
    return %c0_i32, %arg0, %c0_i32_0, %c0_i32_1 : i32, i32, i32, i32
  }
}

</mosaic_0001>

<llo_original>
// kernel: tpu_custom_call.1
$region0: #{tpu_custom_call.1}
  #allocation0 [shape = 'u32[]', space=smem, size = 0x4, offset = 0x4, fixed_abs, tag = 'smem constant byte address 0x4 - core index']
  #allocation1 [shape = 'u32[72,128]{1,0:T(1,128)}', space=vmem, size = 0x9000, scoped, tag = 'internal scratch']
  #allocation2 [shape = 'f32[64,16]{1,0:T(8,128)}', space=vmem, size = 0x8000, scoped, tag = 'scratch operand']
  #allocation9 [shape = 's32[]', space=sflag, size = 0x4, offset = 0, fixed_abs, tag = 'sflag constant byte address 0x0 - dummy sync flag']
  %s0 = inlined_call_operand.hbm [shape: f32[8,16,16], index: 0, kind: input, shape index: {}]
  %s1 = inlined_call_operand.hbm [shape: f32[16,16], index: 1, kind: input, shape index: {}]
  %s2 = inlined_call_operand.hbm [shape: f32[2,8,8,16], index: 2, kind: output, shape index: {}]
  %s3 = sld [smem:[#allocation0]]
  $region49: #{tpu_custom_call.1} parent=0
    _
  %s5 = ssub.s32 1, %s3
  %s6 = scalar_select 0, %s5, %s3
  $region1: #{tpu_custom_call.1} parent=0
    #allocation3 [shape = 'u8[65536]{0}', space=vmem, size = 0x10000, scoped, tag = 'input window, operand 0']
    #allocation4 [shape = 's32[2]{0}', space=sflag, size = 0x8, scoped, tag = 'scoped memory for tpu_custom_call.1']
    #allocation5 [shape = 's32[2]{0}', space=sflag, size = 0x8, scoped, tag = 'scoped memory for tpu_custom_call.1']
    #allocation6 [shape = 'u8[8192]{0}', space=vmem, size = 0x2000, scoped, tag = 'input window, operand 1, single buffered']
    #allocation7 [shape = 's32[1]{0}', space=sflag, size = 0x4, scoped, tag = 'scoped memory for tpu_custom_call.1']
    #allocation8 [shape = 'u8[65536]{0}', space=vmem, size = 0x10000, scoped, tag = 'output window, operand 0']
    %7 = vsyncpa [#allocation4], 0
    %s8 = scalar_lea.sflag [#allocation4], 1
    %9 = vsyncpa %s8, 0
    %10 = vsyncpa [#allocation7], 0
    %11 = vsyncpa [#allocation5], 0
    %s12 = scalar_lea.sflag [#allocation5], 1
    %13 = vsyncpa %s12, 0
    loop: start=0, step=1, limit=4
    $region2: #{tpu_custom_call.1} parent=1 // loop_pre_header
      _
    $region3: #{tpu_custom_call.1} parent=1 // loop_header
      %s15 = sphi 0, %s19
      %p16 = scmp.ge.s32.totalorder %s15, 4
      %s25 = sphi 0, %s27
      %s28 = sphi 0, %s25
      %s29 = sphi 0, %s28
      %s45 = sphi 0, %s29
      %s49 = sphi 0, %s49
      %s51 = sphi 0, %s49
      %s52 = sphi 0, %s51
      %s66 = sphi 0, %s52
      %s72 = sphi 0, %s74
      %s75 = sphi 0, %s72
      %s76 = sphi 0, %s75
      %s92 = sphi 0, %s76
    $region4: #{tpu_custom_call.1} parent=1 // loop_header_branch
      %18 = sbr.rel (%p16) target = $region8
    $region5: #{tpu_custom_call.1} parent=1 // loop_body
      %s20 = ssub.s32 %s15, 1
      %s21 = ssub.s32 %s15, 2
      %s22 = sadd.s32 %s15, 1
      %s23 = ssub.s32 %s15, %s22
      %p24 = scmp.eq.s32.totalorder %s23, 0
      %s26 = sadd.s32 %s25, 1
      %s27 = scalar_select %p24, %s25, %s26
      %p30 = pneg %p24
      %p31 = scmp.eq.s32.totalorder %s15, 1
      %p32 = por %p30, %p31
      %p33 = scmp.ne.s32.totalorder %s25, %s28
      %p34 = scmp.eq.s32.totalorder %s15, 0
      %p35 = por %p33, %p34
      %p36 = scmp.ne.s32.totalorder %s25, %s28
      %p37 = scmp.eq.s32.totalorder %s20, 1
      %p38 = por %p36, %p37
      %p39 = scmp.ne.s32.totalorder %s28, %s29
      %p40 = scmp.eq.s32.totalorder %s20, 0
      %p41 = por %p39, %p40
      %p42 = scmp.ne.s32.totalorder %s28, %s29
      %p43 = scmp.eq.s32.totalorder %s21, 1
      %p44 = por %p42, %p43
      %p46 = scmp.ne.s32.totalorder %s29, %s45
      %p47 = scmp.eq.s32.totalorder %s21, 0
      %p48 = por %p46, %p47
      %s50 = sadd.s32 %s49, 1
      %p53 = scmp.eq.s32.totalorder %s15, 1
      %p54 = scmp.ne.s32.totalorder %s49, %s51
      %p55 = scmp.eq.s32.totalorder %s15, 0
      %p56 = por %p54, %p55
      %p57 = scmp.ne.s32.totalorder %s49, %s51
      %p58 = scmp.eq.s32.totalorder %s20, 1
      %p59 = por %p57, %p58
      %p60 = scmp.ne.s32.totalorder %s51, %s52
      %p61 = scmp.eq.s32.totalorder %s20, 0
      %p62 = por %p60, %p61
      %p63 = scmp.ne.s32.totalorder %s51, %s52
      %p64 = scmp.eq.s32.totalorder %s21, 1
      %p65 = por %p63, %p64
      %p67 = scmp.ne.s32.totalorder %s52, %s66
      %p68 = scmp.eq.s32.totalorder %s21, 0
      %p69 = por %p67, %p68
      %s70 = ssub.s32 %s15, %s22
      %p71 = scmp.eq.s32.totalorder %s70, 0
      %s73 = sadd.s32 %s72, 1
      %s74 = scalar_select %p71, %s72, %s73
      %p77 = pneg %p71
      %p78 = scmp.eq.s32.totalorder %s15, 1
      %p79 = por %p77, %p78
      %p80 = scmp.ne.s32.totalorder %s72, %s75
      %p81 = scmp.eq.s32.totalorder %s15, 0
      %p82 = por %p80, %p81
      %p83 = scmp.ne.s32.totalorder %s72, %s75
      %p84 = scmp.eq.s32.totalorder %s20, 1
      %p85 = por %p83, %p84
      %p86 = scmp.ne.s32.totalorder %s75, %s76
      %p87 = scmp.eq.s32.totalorder %s20, 0
      %p88 = por %p86, %p87
      %p89 = scmp.ne.s32.totalorder %s75, %s76
      %p90 = scmp.eq.s32.totalorder %s21, 1
      %p91 = por %p89, %p90
      %p93 = scmp.ne.s32.totalorder %s76, %s92
      %p94 = scmp.eq.s32.totalorder %s21, 0
      %p95 = por %p93, %p94
      %p96 = scmp.le.s32.totalorder 1, %s15
      %p97 = scmp.lt.s32.totalorder %s15, 3
      %p98 = pnand %p96, %p97
      %p99 = pneg %p98
      // Predicated region
      $region9: #{tpu_custom_call.1} parent=5 // pred_check
        _
      $region10: #{tpu_custom_call.1} parent=5 // pred_check_branch
        %101 = sbr.rel (%p98) target = $region12
      $region11: #{tpu_custom_call.1} parent=5 // pred_region
        %s102 = ssub.s32 %s15, 1
        // Predicated region
        $region13: #{tpu_custom_call.1} parent=11 // pred_check
          %p103 = pneg %p62
        $region14: #{tpu_custom_call.1} parent=11 // pred_check_branch
          %105 = sbr.rel (%p103) target = $region16
        $region15: #{tpu_custom_call.1} parent=11 // pred_region
          %107 = vsyncadd [#allocation7], 0
          %s108 = sshll.u32 %s1, 4
          %s109 = int_to_ptr.hbm [resolvable:$true] %s108
          %s110 = sshll.u32 [#allocation6], 4
          %s111 = int_to_ptr.vmem [resolvable:$true] %s110
          %116 = dma.hbm_to_vmem [thread:$0]  %s109, 256, %s111, [#allocation7], 128, 128, 8
        $region16: #{tpu_custom_call.1} parent=11 // pred_fallthru
          _
      $region12: #{tpu_custom_call.1} parent=5 // pred_fallthru
        _
      %p117 = scmp.lt.s32.totalorder %s15, 2
      // Predicated region
      $region17: #{tpu_custom_call.1} parent=5 // pred_check
        %p118 = pneg %p117
      $region18: #{tpu_custom_call.1} parent=5 // pred_check_branch
        %120 = sbr.rel (%p118) target = $region20
      $region19: #{tpu_custom_call.1} parent=5 // pred_region
        // Predicated region
        $region21: #{tpu_custom_call.1} parent=19 // pred_check
          %p121 = pneg %p35
        $region22: #{tpu_custom_call.1} parent=19 // pred_check_branch
          %123 = sbr.rel (%p121) target = $region24
        $region23: #{tpu_custom_call.1} parent=19 // pred_region
          %s124 = sand.u32 %s25, 1
          %s125 = scalar_lea.sflag [#allocation4], %s124
          %s126 = sand.u32 %s25, 1
          %s127 = smul.addr %s126, 64
          %s128 = scalar_lea.vmem [#allocation3], %s127
          %s129 = smul.u32 4, %s15
          %131 = vsyncadd %s125, 0
          %s132 = smul.addr %s129, 2
          %s133 = smul.addr %s132, 8
          %s134 = scalar_lea.hbm %s0, %s133
          %s135 = sshll.u32 %s134, 4
          %s136 = int_to_ptr.hbm [resolvable:$true] %s135
          %s137 = sshll.u32 %s128, 4
          %s138 = int_to_ptr.vmem [resolvable:$true] %s137
          %143 = dma.hbm_to_vmem [thread:$0]  %s136, 1024, %s138, %s125, 128, 128, 8
        $region24: #{tpu_custom_call.1} parent=19 // pred_fallthru
          _
      $region20: #{tpu_custom_call.1} parent=5 // pred_fallthru
        _
      %p144 = scmp.le.s32.totalorder 1, %s15
      %p145 = scmp.lt.s32.totalorder %s15, 3
      %p146 = pnand %p144, %p145
      %p147 = pneg %p146
      // Predicated region
      $region25: #{tpu_custom_call.1} parent=5 // pred_check
        _
      $region26: #{tpu_custom_call.1} parent=5 // pred_check_branch
        %149 = sbr.rel (%p146) target = $region28
      $region27: #{tpu_custom_call.1} parent=5 // pred_region
        %s150 = ssub.s32 %s15, 1
        %s151 = sand.u32 %s28, 1
        %s152 = scalar_lea.sflag [#allocation4], %s151
        %s153 = sand.u32 %s28, 1
        %s154 = smul.addr %s153, 64
        %s155 = scalar_lea.vmem [#allocation3], %s154
        // Predicated region
        $region29: #{tpu_custom_call.1} parent=27 // pred_check
          %p156 = pneg %p41
        $region30: #{tpu_custom_call.1} parent=27 // pred_check_branch
          %158 = sbr.rel (%p156) target = $region32
        $region31: #{tpu_custom_call.1} parent=27 // pred_region
          %160 = dma.done %s152, 1024
        $region32: #{tpu_custom_call.1} parent=27 // pred_fallthru
          _
        // Predicated region
        $region33: #{tpu_custom_call.1} parent=27 // pred_check
          %p161 = pneg %p62
        $region34: #{tpu_custom_call.1} parent=27 // pred_check_branch
          %163 = sbr.rel (%p161) target = $region36
        $region35: #{tpu_custom_call.1} parent=27 // pred_region
          %165 = dma.done [#allocation7], 256
        $region36: #{tpu_custom_call.1} parent=27 // pred_fallthru
          _
        %s166 = sand.u32 %s28, 1
        %s167 = scalar_lea.sflag [#allocation4], %s166
        %s168 = sand.u32 %s28, 1
        %s169 = smul.addr %s168, 64
        %s170 = scalar_lea.vmem [#allocation3], %s169
        %p171 = pneg %p41
        %p172 = pneg %p38
        %p173 = pneg %p62
        %p174 = pneg %p59
        %p175 = pneg %p88
        %p176 = pneg %p85
        %s177 = sand.u32 %s75, 1
        %s178 = scalar_lea.sflag [#allocation5], %s177
        %s179 = sand.u32 %s75, 1
        %s180 = smul.addr %s179, 64
        %s181 = scalar_lea.vmem [#allocation8], %s180
        %s182 = smul.u32 4, %s20
        %s183 = smul.u32 4, %s20
        %v184 = vld [vmem:[%s155] sm:$0xff]
        %v185 = vld [vmem:[%s155 + $0x8] sm:$0xff]
        %v186 = vld [vmem:[%s155 + $0x10] sm:$0xff]
        %v187 = vld [vmem:[%s155 + $0x18] sm:$0xff]
        %v188 = vld [vmem:[%s155 + $0x20] sm:$0xff]
        %v189 = vld [vmem:[%s155 + $0x28] sm:$0xff]
        %v190 = vld [vmem:[%s155 + $0x30] sm:$0xff]
        %v191 = vld [vmem:[%s155 + $0x38] sm:$0xff]
        %v192 = vld [vmem:[#allocation6] sm:$0xff]
        %v193 = vld [vmem:[#allocation6 + $0x8] sm:$0xff]
        %vm194 = vcmask 130048
        %v196 = vsel %vm194, %v184, 0
        %v199 = vsel %vm194, %v185, 0
        %v202 = vsel %vm194, %v186, 0
        %v205 = vsel %vm194, %v187, 0
        %v208 = vsel %vm194, %v188, 0
        %v211 = vsel %vm194, %v189, 0
        %v214 = vsel %vm194, %v190, 0
        %v217 = vsel %vm194, %v191, 0
        %219 = vmatpush.msra.mxu0 0.0
        %220 = vmatpush.msra.mxu0 0.0
        %221 = vmatpush.msra.mxu0 0.0
        %222 = vmatpush.msra.mxu0 0.0
        %223 = vmatpush.msra.mxu0 0.0
        %224 = vmatpush.msra.mxu0 0.0
        %225 = vmatpush.msra.mxu0 0.0
        %226 = vmatpush.msra.mxu0 0.0
        %227 = vmatpush.msra.mxu0 0.0
        %228 = vmatpush.msra.mxu0 0.0
        %229 = vmatpush.msra.mxu0 0.0
        %230 = vmatpush.msra.mxu0 0.0
        %231 = vmatpush.msra.mxu0 0.0
        %232 = vmatpush.msra.mxu0 0.0
        %233 = vmatpush.msra.mxu0 %v193
        %234 = vmatpush.msra.mxu0 %v192
        %235 = vmatmul.f32.gmra.mxu0 %v196
        %v236 = vpop.f32.mrf.mxu0
        %v237 = vadd.f32 0.0, %v236
        %238 = vmatmul.f32.gmra.mxu0 %v199
        %v239 = vpop.f32.mrf.mxu0
        %v240 = vadd.f32 0.0, %v239
        %241 = vmatmul.f32.gmra.mxu0 %v202
        %v242 = vpop.f32.mrf.mxu0
        %v243 = vadd.f32 0.0, %v242
        %244 = vmatmul.f32.gmra.mxu0 %v205
        %v245 = vpop.f32.mrf.mxu0
        %v246 = vadd.f32 0.0, %v245
        %247 = vmatmul.f32.gmra.mxu0 %v208
        %v248 = vpop.f32.mrf.mxu0
        %v249 = vadd.f32 0.0, %v248
        %250 = vmatmul.f32.gmra.mxu0 %v211
        %v251 = vpop.f32.mrf.mxu0
        %v252 = vadd.f32 0.0, %v251
        %253 = vmatmul.f32.gmra.mxu0 %v214
        %v254 = vpop.f32.mrf.mxu0
        %v255 = vadd.f32 0.0, %v254
        %256 = vmatmul.f32.gmra.mxu0 %v217
        %v257 = vpop.f32.mrf.mxu0
        %v258 = vadd.f32 0.0, %v257
        %259 = vdwg.mxu0
        %260 = vst.msk [vmem:[#allocation2] sm:$0xff] %vm194, %v237
        %261 = vst.msk [vmem:[#allocation2 + $0x8] sm:$0xff] %vm194, %v240
        %262 = vst.msk [vmem:[#allocation2 + $0x10] sm:$0xff] %vm194, %v243
        %263 = vst.msk [vmem:[#allocation2 + $0x18] sm:$0xff] %vm194, %v246
        %264 = vst.msk [vmem:[#allocation2 + $0x20] sm:$0xff] %vm194, %v249
        %265 = vst.msk [vmem:[#allocation2 + $0x28] sm:$0xff] %vm194, %v252
        %266 = vst.msk [vmem:[#allocation2 + $0x30] sm:$0xff] %vm194, %v255
        %267 = vst.msk [vmem:[#allocation2 + $0x38] sm:$0xff] %vm194, %v258
        %v268 = vld [vmem:[#allocation2] ss:$2 sm:$0xff]
        %s269 = scalar_lea.vmem [#allocation2], 16
        %v270 = vld [vmem:[%s269] ss:$2 sm:$0xff]
        %s271 = scalar_lea.vmem [#allocation2], 32
        %v272 = vld [vmem:[%s271] ss:$2 sm:$0xff]
        %s273 = scalar_lea.vmem [#allocation2], 48
        %v274 = vld [vmem:[%s273] ss:$2 sm:$0xff]
        %s275 = scalar_lea.vmem [#allocation2], 1
        %v276 = vld [vmem:[%s275] ss:$2 sm:$0xff]
        %s277 = scalar_lea.vmem [#allocation2], 17
        %v278 = vld [vmem:[%s277] ss:$2 sm:$0xff]
        %s279 = scalar_lea.vmem [#allocation2], 33
        %v280 = vld [vmem:[%s279] ss:$2 sm:$0xff]
        %s281 = scalar_lea.vmem [#allocation2], 49
        %v282 = vld [vmem:[%s281] ss:$2 sm:$0xff]
        %v283 = vadd.f32 %v268, %v276
        %v284 = vadd.f32 %v270, %v278
        %v285 = vadd.f32 %v272, %v280
        %v286 = vadd.f32 %v274, %v282
        %v287 = vmul.f32 %v283, 0.5
        %v288 = vmul.f32 %v284, 0.5
        %v289 = vmul.f32 %v285, 0.5
        %v290 = vmul.f32 %v286, 0.5
        %v291 = vmul.f32 %v276, -1.0
        %v292 = vmul.f32 %v278, -1.0
        %v293 = vmul.f32 %v280, -1.0
        %v294 = vmul.f32 %v282, -1.0
        %v295 = vadd.f32 %v268, %v291
        %v296 = vadd.f32 %v270, %v292
        %v297 = vadd.f32 %v272, %v293
        %v298 = vadd.f32 %v274, %v294
        %v299 = vmul.f32 %v295, 0.5
        %v300 = vmul.f32 %v296, 0.5
        %v301 = vmul.f32 %v297, 0.5
        %v302 = vmul.f32 %v298, 0.5
        %303 = vst.msk [vmem:[%s181] sm:$0xff] %vm194, %v287
        %304 = vst.msk [vmem:[%s181 + $0x8] sm:$0xff] %vm194, %v288
        %305 = vst.msk [vmem:[%s181 + $0x10] sm:$0xff] %vm194, %v289
        %306 = vst.msk [vmem:[%s181 + $0x18] sm:$0xff] %vm194, %v290
        %s307 = scalar_lea.vmem %s181, 32 [#allocation8]
        %308 = vst.msk [vmem:[%s307] sm:$0xff] %vm194, %v299
        %309 = vst.msk [vmem:[%s307 + $0x8] sm:$0xff] %vm194, %v300
        %310 = vst.msk [vmem:[%s307 + $0x10] sm:$0xff] %vm194, %v301
        %311 = vst.msk [vmem:[%s307 + $0x18] sm:$0xff] %vm194, %v302
        %s312 = sand.u32 %s75, 1
        %s313 = scalar_lea.sflag [#allocation5], %s312
        %s314 = sand.u32 %s75, 1
        %s315 = smul.addr %s314, 64
        %s316 = scalar_lea.vmem [#allocation8], %s315
        // Predicated region
        $region37: #{tpu_custom_call.1} parent=27 // pred_check
          %p317 = pneg %p85
        $region38: #{tpu_custom_call.1} parent=27 // pred_check_branch
          %319 = sbr.rel (%p317) target = $region40
        $region39: #{tpu_custom_call.1} parent=27 // pred_region
          #allocation10 [shape = 'u32[6]{0}', space=smem, size = 0x18, scoped, tag = 'DMA stride descriptor']
          %s320 = smul.u32 4, %s20
          %322 = vsyncadd %s313, 0
          %s323 = smul.addr %s320, 8
          %s324 = scalar_lea.hbm %s2, %s323
          %s326 = sshll.u32 1, 14
          %s327 = sxor.u32 4294967295, %s326
          %s330 = sshll.u32 7, 18
          %s331 = sxor.u32 4294967295, %s330
          %s332 = sand.u32 0, %s331
          %s334 = sor.u32 %s332, 0
          %s335 = sshll.u32 %s316, 4
          %s336 = int_to_ptr.vmem [resolvable:$true] %s335
          %s337 = sshll.u32 %s324, 4
          %s338 = int_to_ptr.hbm [resolvable:$true] %s337
          %344 = sst [smem:[#allocation10]] 512
          %s345 = scalar_lea.smem [#allocation10], 1
          %346 = sst [smem:[%s345]] 1024
          %s347 = scalar_lea.smem [#allocation10], 2
          %348 = sst [smem:[%s347]] 4
          %s349 = scalar_lea.smem [#allocation10], 3
          %350 = sst [smem:[%s349]] 128
          %s351 = scalar_lea.smem [#allocation10], 4
          %352 = sst [smem:[%s351]] 128
          %s353 = scalar_lea.smem [#allocation10], 5
          %354 = sst [smem:[%s353]] 8
          %356 = dma.general %s336, 1024, %s338, %s313, [#allocation9], [#allocation10], %s334, 0
        $region40: #{tpu_custom_call.1} parent=27 // pred_fallthru
          _
      $region28: #{tpu_custom_call.1} parent=5 // pred_fallthru
        _
      %p357 = scmp.le.s32.totalorder 2, %s15
      // Predicated region
      $region41: #{tpu_custom_call.1} parent=5 // pred_check
        %p358 = pneg %p357
      $region42: #{tpu_custom_call.1} parent=5 // pred_check_branch
        %360 = sbr.rel (%p358) target = $region44
      $region43: #{tpu_custom_call.1} parent=5 // pred_region
        %s361 = ssub.s32 %s15, 2
        // Predicated region
        $region45: #{tpu_custom_call.1} parent=43 // pred_check
          %p362 = pneg %p91
        $region46: #{tpu_custom_call.1} parent=43 // pred_check_branch
          %364 = sbr.rel (%p362) target = $region48
        $region47: #{tpu_custom_call.1} parent=43 // pred_region
          %s365 = sand.u32 %s76, 1
          %s366 = scalar_lea.sflag [#allocation5], %s365
          %s367 = sand.u32 %s76, 1
          %s368 = smul.addr %s367, 64
          %s369 = scalar_lea.vmem [#allocation8], %s368
          %371 = dma.done %s366, 1024
        $region48: #{tpu_custom_call.1} parent=43 // pred_fallthru
          _
      $region44: #{tpu_custom_call.1} parent=5 // pred_fallthru
        _
    $region6: #{tpu_custom_call.1} parent=1 // loop_footer
      %s19 = sadd.s32 1, %s15
    $region7: #{tpu_custom_call.1} parent=1 // loop_footer_branch
      %14 = sbr.rel target = $region3
    $region8: #{tpu_custom_call.1} parent=1 // loop_exit
      _
    %372 = vsyncpa [#allocation4], 1
    %s373 = scalar_lea.sflag [#allocation4], 1
    %374 = vsyncpa %s373, 1
    %375 = vsyncpa [#allocation7], 1
    %376 = vsyncpa [#allocation5], 1
    %s377 = scalar_lea.sflag [#allocation5], 1
    %378 = vsyncpa %s377, 1

</llo_original>
